<compile_context>
chip_gen: v5e
topology: v5e:2x2
jax: 0.10.0
libtpu: 0.0.40
codegen_flags: <defaults>
</compile_context>

<pallas_src>
import functools

import jax
import jax.numpy as jnp
from jax.experimental import pallas as pl
from jax.experimental.pallas import tpu as pltpu

BN_EPS = 1e-5
NEG_SLOPE = 0.1
LANE = 128


# --------------------------------------------------------------------------- #
# Kernels
# --------------------------------------------------------------------------- #
def _conv_stats_kernel(cols_ref, w_ref, conv_ref, stats_ref):
    """Pass 1: one MXU matmul per row tile + per-tile per-channel sum / sumsq.

    cols_ref : (TM, K)      im2col rows (K = KH*KW*Cin), f32
    w_ref    : (K,  CP)     folded conv weights, channel-padded to CP (lane dense)
    conv_ref : (TM, CP)     conv output tile (pre-BN), f32
    stats_ref: (1, 2, CP)   row 0 = per-channel sum over tile, row 1 = sum of squares
    """
    y = jnp.dot(cols_ref[...], w_ref[...], preferred_element_type=jnp.float32)
    conv_ref[...] = y
    s1 = jnp.sum(y, axis=0, keepdims=True)        # (1, CP)
    s2 = jnp.sum(y * y, axis=0, keepdims=True)    # (1, CP)
    stats_ref[...] = jnp.concatenate([s1, s2], axis=0)[None]


def _bn_act_kernel(conv_ref, scale_ref, shift_ref, o_ref):
    """Pass 2: folded BatchNorm (single per-channel FMA) + LeakyReLU(0.1).

    conv_ref : (TM, CP)   pre-BN conv output tile
    scale_ref: (1,  CP)   gamma * rsqrt(var + eps)
    shift_ref: (1,  CP)   beta - mean * scale
    o_ref    : (TM, CP)
    """
    y = conv_ref[...] * scale_ref[...] + shift_ref[...]
    o_ref[...] = jnp.where(y > 0, y, NEG_SLOPE * y)


# --------------------------------------------------------------------------- #
# Wrapper
# --------------------------------------------------------------------------- #
def _pick_row_tile(n_rows: int, target: int = 512) -> int:
    """Largest multiple-of-8 divisor of n_rows <= target (prefers >=2 tiles)."""
    target = max(8, min(target, max(8, n_rows // 2)))
    start = (min(target, n_rows) // 8) * 8
    for t in range(start, 0, -8):
        if n_rows % t == 0:
            return t
    return n_rows  # tiny problems: single full-size block


@functools.partial(jax.jit, static_argnames=("stride", "padding"))
def cnnblock_forward(x_nchw, w_oihw, gamma, beta, *, stride=1, padding=1):
    """NCHW/OIHW (PyTorch) -> Pallas kernels -> NCHW output."""
    N, Cin, H, W = x_nchw.shape
    Cout, _, KH, KW = w_oihw.shape
    Ho = (H + 2 * padding - KH) // stride + 1
    Wo = (W + 2 * padding - KW) // stride + 1
    K = KH * KW * Cin
    CP = ((Cout + LANE - 1) // LANE) * LANE       # lane-dense channel padding
    R = N * Ho * Wo                               # flattened output rows

    # --- im2col in the wrapper (fused XLA transpose/pad/slice/concat).
    # For small Cin (=3 here) this costs 27 f32/pixel of input traffic, well
    # below the Cout-padded output traffic; for large-Cin layers the taps
    # should instead be built in-kernel from a halo'd input tile.
    x_nhwc = jnp.transpose(x_nchw, (0, 2, 3, 1)).astype(jnp.float32)
    x_pad = jnp.pad(x_nhwc, ((0, 0), (padding, padding), (padding, padding), (0, 0)))
    taps = [
        x_pad[:,
              kh:kh + (Ho - 1) * stride + 1:stride,
              kw:kw + (Wo - 1) * stride + 1:stride, :]
        for kh in range(KH) for kw in range(KW)
    ]
    cols = jnp.concatenate(taps, axis=-1).reshape(R, K)          # (R, 27)

    # --- weights / BN params, channel-padded to CP (lane dense).
    w2 = jnp.transpose(w_oihw, (2, 3, 1, 0)).astype(jnp.float32).reshape(K, Cout)
    w2 = jnp.pad(w2, ((0, 0), (0, CP - Cout)))                   # (K, CP)
    gamma_p = jnp.pad(gamma.astype(jnp.float32), (0, CP - Cout))  # (CP,)
    beta_p = jnp.pad(beta.astype(jnp.float32), (0, CP - Cout))    # (CP,)

    TM = _pick_row_tile(R)
    n_tiles = R // TM

    cparams = pltpu.CompilerParams(
        dimension_semantics=("parallel",),        # shard row tiles across TCs (v7x)
        vmem_limit_bytes=32 * 1024 * 1024,        # explicit scoped-VMEM budget
    )

    # ---------------- pass 1: conv + per-tile channel statistics -------------
    conv_out, stats = pl.pallas_call(
        _conv_stats_kernel,
        out_shape=(
            jax.ShapeDtypeStruct((R, CP), jnp.float32),
            jax.ShapeDtypeStruct((n_tiles, 2, CP), jnp.float32),
        ),
        grid=(n_tiles,),
        in_specs=[
            pl.BlockSpec((TM, K), lambda i: (i, 0)),     # im2col row tile
            pl.BlockSpec((K, CP), lambda i: (0, 0)),     # folded weights (resident)
        ],
        out_specs=(
            pl.BlockSpec((TM, CP), lambda i: (i, 0)),    # conv output tile
            pl.BlockSpec((1, 2, CP), lambda i: (i, 0, 0)),  # per-tile sum/sumsq
        ),
        compiler_params=cparams,
    )(cols, w2)

    # --- fold BatchNorm into a per-channel scale/shift (tiny (CP,)-sized math).
    tot = jnp.sum(stats, axis=0)                           # (2, CP)
    mean = tot[0] / R
    var = jnp.maximum(tot[1] / R - mean * mean, 0.0)       # biased batch variance
    scale = gamma_p * jax.lax.rsqrt(var + BN_EPS)          # (CP,)
    shift = beta_p - mean * scale                          # (CP,)
    scale2 = scale.reshape(1, CP)
    shift2 = shift.reshape(1, CP)

    # ---------------- pass 2: normalize (one FMA) + LeakyReLU ----------------
    out2d = pl.pallas_call(
        _bn_act_kernel,
        out_shape=jax.ShapeDtypeStruct((R, CP), jnp.float32),
        grid=(n_tiles,),
        in_specs=[
            pl.BlockSpec((TM, CP), lambda i: (i, 0)),
            pl.BlockSpec((1, CP), lambda i: (0, 0)),
            pl.BlockSpec((1, CP), lambda i: (0, 0)),
        ],
        out_specs=pl.BlockSpec((TM, CP), lambda i: (i, 0)),
        compiler_params=cparams,
    )(conv_out, scale2, shift2)

    # free metadata reshape, slice away channel padding, back to NCHW
    out = out2d.reshape(N, Ho, Wo, CP)[..., :Cout]
    return jnp.transpose(out, (0, 3, 1, 2))

    # TODO(synk): BatchNorm2d running_mean / running_var buffer updates (a
    # training-time side effect of the PyTorch module) are not emitted; the
    # forward output itself (batch-stat normalization) is fully implemented.


# --------------------------------------------------------------------------- #
# Reference + test
# --------------------------------------------------------------------------- #
def _reference(x_nchw, w_oihw, gamma, beta, stride=1, padding=1):
    """Plain-JAX reference mirroring the PyTorch forward (training-mode BN)."""
    y = jax.lax.conv_general_dilated(
        x_nchw.astype(jnp.float32),
        w_oihw.astype(jnp.float32),
        window_strides=(stride, stride),
        padding=[(padding, padding), (padding, padding)],
        dimension_numbers=("NCHW", "OIHW", "NCHW"),
    )
    mean = y.mean(axis=(0, 2, 3), keepdims=True)
    var = ((y - mean) ** 2).mean(axis=(0, 2, 3), keepdims=True)
    y = (y - mean) / jnp.sqrt(var + BN_EPS)
    y = y * gamma.reshape(1, -1, 1, 1) + beta.reshape(1, -1, 1, 1)
    return jnp.where(y > 0, y, NEG_SLOPE * y)


if __name__ == "__main__":
    # Small deterministic problem: CNNBlock(3, 16, kernel_size=3, stride=1, padding=1)
    N, Cin, H, W = 2, 3, 16, 16
    Cout, KH, KW = 16, 3, 3

    key = jax.random.PRNGKey(0)
    kx, kw_, kg, kb = jax.random.split(key, 4)

    x = jax.random.normal(kx, (N, Cin, H, W), dtype=jnp.float32)         # NCHW
    fan_in = Cin * KH * KW
    bound = 1.0 / (fan_in ** 0.5)
    w = jax.random.uniform(kw_, (Cout, Cin, KH, KW), jnp.float32,
                           minval=-bound, maxval=bound)                   # OIHW, bias=False
    gamma = jax.random.uniform(kg, (Cout,), jnp.float32, minval=0.5, maxval=1.5)
    beta = 0.1 * jax.random.normal(kb, (Cout,), dtype=jnp.float32)

    out = cnnblock_forward(x, w, gamma, beta, stride=1, padding=1)
    out = jax.block_until_ready(out)

    ref = _reference(x, w, gamma, beta, stride=1, padding=1)
    assert out.shape == (N, Cout, H, W)
    assert jnp.allclose(out, ref, rtol=1e-4, atol=1e-4), "mismatch vs JAX reference"

    print("KERNEL_OK")
</pallas_src>

<mosaic_0001>
module attributes {stable_mosaic.version = 11 : i64} {
  func.func @_conv_stats_kernel(%arg0: i32, %arg1: memref<256x27xf32, #tpu.memory_space<vmem>>, %arg2: memref<27x128xf32, #tpu.memory_space<vmem>>, %arg3: memref<256x128xf32, #tpu.memory_space<vmem>>, %arg4: memref<1x2x128xf32, #tpu.memory_space<vmem>>) attributes {dimension_semantics = [#tpu.dimension_semantics<parallel>], iteration_bounds = array<i64: 2>, scalar_prefetch = 0 : i64, scratch_operands = 0 : i64, tpu.core_type = #tpu.core_type<tc>, window_params = [{transform_indices = @transform_0, window_bounds = array<i64: 256, 27>}, {pipeline_mode = #tpu.pipeline_mode<synchronous>, transform_indices = @transform_1, window_bounds = array<i64: 27, 128>}, {transform_indices = @transform_2, window_bounds = array<i64: 256, 128>}, {transform_indices = @transform_3, window_bounds = array<i64: 1, 2, 128>}]} {
    %c0 = arith.constant 0 : index
    %c0_0 = arith.constant 0 : index
    %0 = vector.load %arg1[%c0, %c0_0] : memref<256x27xf32, #tpu.memory_space<vmem>>, vector<256x27xf32>
    %c0_1 = arith.constant 0 : index
    %c0_2 = arith.constant 0 : index
    %1 = vector.load %arg2[%c0_1, %c0_2] : memref<27x128xf32, #tpu.memory_space<vmem>>, vector<27x128xf32>
    %cst = arith.constant dense<0.000000e+00> : vector<256x128xf32>
    %2 = tpu.matmul %0, %1, %cst {dimension_numbers = #tpu.dot_dimension_numbers<[1], [0], [0], [1], [0, 0, 1, 1], [], []>} : vector<256x27xf32>, vector<27x128xf32>, vector<256x128xf32> -> vector<256x128xf32>
    %c0_3 = arith.constant 0 : index
    %c0_4 = arith.constant 0 : index
    %3 = vector.load %arg3[%c0_3, %c0_4] : memref<256x128xf32, #tpu.memory_space<vmem>>, vector<256x128xf32>
    tpu.vector_store %arg3[%c0_3, %c0_4], %2 {strides = array<i32>} : memref<256x128xf32, #tpu.memory_space<vmem>>, vector<256x128xf32>,
    %cst_5 = arith.constant dense<0.000000e+00> : vector<128xf32>
    %4 = vector.multi_reduction <add>, %2, %cst_5 [0] : vector<256x128xf32> to vector<128xf32>
    %5 = vector.shape_cast %4 : vector<128xf32> to vector<1x128xf32>
    %6 = arith.mulf %2, %2 : vector<256x128xf32>
    %cst_6 = arith.constant dense<0.000000e+00> : vector<128xf32>
    %7 = vector.multi_reduction <add>, %6, %cst_6 [0] : vector<256x128xf32> to vector<128xf32>
    %8 = vector.shape_cast %7 : vector<128xf32> to vector<1x128xf32>
    %9 = tpu.concatenate %5, %8 in 0 : vector<1x128xf32>, vector<1x128xf32> -> vector<2x128xf32>
    %10 = vector.shape_cast %9 : vector<2x128xf32> to vector<1x2x128xf32>
    %c0_7 = arith.constant 0 : index
    %c0_8 = arith.constant 0 : index
    %c0_9 = arith.constant 0 : index
    %11 = vector.load %arg4[%c0_7, %c0_8, %c0_9] : memref<1x2x128xf32, #tpu.memory_space<vmem>>, vector<1x2x128xf32>
    tpu.vector_store %arg4[%c0_7, %c0_8, %c0_9], %10 {strides = array<i32>} : memref<1x2x128xf32, #tpu.memory_space<vmem>>, vector<1x2x128xf32>,
    return
  }
  func.func @transform_0(%arg0: i32) -> (i32, i32) {
    %c0_i32 = arith.constant 0 : i32
    %c0_i32_0 = arith.constant 0 : i32
    return %arg0, %c0_i32 : i32, i32
  }
  func.func @transform_1(%arg0: i32) -> (i32, i32) {
    %c0_i32 = arith.constant 0 : i32
    %c0_i32_0 = arith.constant 0 : i32
    %c0_i32_1 = arith.constant 0 : i32
    return %c0_i32, %c0_i32_0 : i32, i32
  }
  func.func @transform_2(%arg0: i32) -> (i32, i32) {
    %c0_i32 = arith.constant 0 : i32
    %c0_i32_0 = arith.constant 0 : i32
    return %arg0, %c0_i32 : i32, i32
  }
  func.func @transform_3(%arg0: i32) -> (i32, i32, i32) {
    %c0_i32 = arith.constant 0 : i32
    %c0_i32_0 = arith.constant 0 : i32
    %c0_i32_1 = arith.constant 0 : i32
    return %arg0, %c0_i32, %c0_i32_0 : i32, i32, i32
  }
}

module attributes {stable_mosaic.version = 11 : i64} {
  func.func @_bn_act_kernel(%arg0: i32, %arg1: memref<256x128xf32, #tpu.memory_space<vmem>>, %arg2: memref<1x128xf32, #tpu.memory_space<vmem>>, %arg3: memref<1x128xf32, #tpu.memory_space<vmem>>, %arg4: memref<256x128xf32, #tpu.memory_space<vmem>>) attributes {dimension_semantics = [#tpu.dimension_semantics<parallel>], iteration_bounds = array<i64: 2>, scalar_prefetch = 0 : i64, scratch_operands = 0 : i64, tpu.core_type = #tpu.core_type<tc>, window_params = [{transform_indices = @transform_0, window_bounds = array<i64: 256, 128>}, {pipeline_mode = #tpu.pipeline_mode<synchronous>, transform_indices = @transform_1, window_bounds = array<i64: 1, 128>}, {pipeline_mode = #tpu.pipeline_mode<synchronous>, transform_indices = @transform_2, window_bounds = array<i64: 1, 128>}, {transform_indices = @transform_3, window_bounds = array<i64: 256, 128>}]} {
    %c0 = arith.constant 0 : index
    %c0_0 = arith.constant 0 : index
    %0 = vector.load %arg1[%c0, %c0_0] : memref<256x128xf32, #tpu.memory_space<vmem>>, vector<256x128xf32>
    %c0_1 = arith.constant 0 : index
    %c0_2 = arith.constant 0 : index
    %1 = vector.load %arg2[%c0_1, %c0_2] : memref<1x128xf32, #tpu.memory_space<vmem>>, vector<1x128xf32>
    %2 = vector.broadcast %1 : vector<1x128xf32> to vector<256x128xf32>
    %3 = arith.mulf %0, %2 : vector<256x128xf32>
    %c0_3 = arith.constant 0 : index
    %c0_4 = arith.constant 0 : index
    %4 = vector.load %arg3[%c0_3, %c0_4] : memref<1x128xf32, #tpu.memory_space<vmem>>, vector<1x128xf32>
    %5 = vector.broadcast %4 : vector<1x128xf32> to vector<256x128xf32>
    %6 = arith.addf %3, %5 : vector<256x128xf32>
    %cst = arith.constant 0.000000e+00 : f32
    %7 = vector.broadcast %cst : f32 to vector<256x128xf32>
    %8 = arith.cmpf ogt, %6, %7 : vector<256x128xf32>
    %cst_5 = arith.constant 1.000000e-01 : f32
    %9 = vector.broadcast %cst_5 : f32 to vector<256x128xf32>
    %10 = arith.mulf %9, %6 : vector<256x128xf32>
    %11 = arith.select %8, %6, %10 : vector<256x128xi1>, vector<256x128xf32>
    %c0_6 = arith.constant 0 : index
    %c0_7 = arith.constant 0 : index
    %12 = vector.load %arg4[%c0_6, %c0_7] : memref<256x128xf32, #tpu.memory_space<vmem>>, vector<256x128xf32>
    tpu.vector_store %arg4[%c0_6, %c0_7], %11 {strides = array<i32>} : memref<256x128xf32, #tpu.memory_space<vmem>>, vector<256x128xf32>,
    return
  }
  func.func @transform_0(%arg0: i32) -> (i32, i32) {
    %c0_i32 = arith.constant 0 : i32
    %c0_i32_0 = arith.constant 0 : i32
    return %arg0, %c0_i32 : i32, i32
  }
  func.func @transform_1(%arg0: i32) -> (i32, i32) {
    %c0_i32 = arith.constant 0 : i32
    %c0_i32_0 = arith.constant 0 : i32
    %c0_i32_1 = arith.constant 0 : i32
    return %c0_i32, %c0_i32_0 : i32, i32
  }
  func.func @transform_2(%arg0: i32) -> (i32, i32) {
    %c0_i32 = arith.constant 0 : i32
    %c0_i32_0 = arith.constant 0 : i32
    %c0_i32_1 = arith.constant 0 : i32
    return %c0_i32, %c0_i32_0 : i32, i32
  }
  func.func @transform_3(%arg0: i32) -> (i32, i32) {
    %c0_i32 = arith.constant 0 : i32
    %c0_i32_0 = arith.constant 0 : i32
    return %arg0, %c0_i32 : i32, i32
  }
}

</mosaic_0001>

<llo_original>
// kernel: cnnblock_forward.3
$region0: #{cnnblock_forward.3}
  #allocation0 [shape = 'u32[]', space=smem, size = 0x4, offset = 0x4, fixed_abs, tag = 'smem constant byte address 0x4 - core index']
  #allocation1 [shape = 'u32[72,128]{1,0:T(1,128)}', space=vmem, size = 0x9000, scoped, tag = 'internal scratch']
  %s0 = inlined_call_operand.vmem [shape: f32[512,128], index: 0, kind: input, shape index: {}]
  %s1 = inlined_call_operand.vmem [shape: f32[1,128], index: 1, kind: input, shape index: {}]
  %s2 = inlined_call_operand.vmem [shape: f32[1,128], index: 2, kind: input, shape index: {}]
  %s3 = inlined_call_operand.vmem [shape: f32[512,128], index: 3, kind: output, shape index: {}]
  %s4 = sld [smem:[#allocation0]]
  $region45: #{cnnblock_forward.3} parent=0
    _
  %s6 = ssub.s32 1, %s4
  %s7 = scalar_select 0, %s6, %s4
  loop: start=0, step=1, limit=4
  $region2: #{cnnblock_forward.3} parent=0 // loop_pre_header
    _
  $region3: #{cnnblock_forward.3} parent=0 // loop_header
    %s9 = sphi 0, %s13
    %p10 = scmp.ge.s32.totalorder %s9, 4
    %s19 = sphi 0, %s21
    %s22 = sphi 0, %s19
    %s23 = sphi 0, %s22
    %s39 = sphi 0, %s23
    %s43 = sphi 0, %s43
    %s45 = sphi 0, %s43
    %s46 = sphi 0, %s45
    %s60 = sphi 0, %s46
    %s64 = sphi 0, %s64
    %s66 = sphi 0, %s64
    %s67 = sphi 0, %s66
    %s81 = sphi 0, %s67
    %s87 = sphi 0, %s89
    %s90 = sphi 0, %s87
    %s91 = sphi 0, %s90
    %s107 = sphi 0, %s91
  $region4: #{cnnblock_forward.3} parent=0 // loop_header_branch
    %12 = sbr.rel (%p10) target = $region8
  $region5: #{cnnblock_forward.3} parent=0 // loop_body
    %s14 = ssub.s32 %s9, 1
    %s15 = ssub.s32 %s9, 2
    %s16 = sadd.s32 %s9, 1
    %s17 = ssub.s32 %s9, %s16
    %p18 = scmp.eq.s32.totalorder %s17, 0
    %s20 = sadd.s32 %s19, 1
    %s21 = scalar_select %p18, %s19, %s20
    %p24 = pneg %p18
    %p25 = scmp.eq.s32.totalorder %s9, 1
    %p26 = por %p24, %p25
    %p27 = scmp.ne.s32.totalorder %s19, %s22
    %p28 = scmp.eq.s32.totalorder %s9, 0
    %p29 = por %p27, %p28
    %p30 = scmp.ne.s32.totalorder %s19, %s22
    %p31 = scmp.eq.s32.totalorder %s14, 1
    %p32 = por %p30, %p31
    %p33 = scmp.ne.s32.totalorder %s22, %s23
    %p34 = scmp.eq.s32.totalorder %s14, 0
    %p35 = por %p33, %p34
    %p36 = scmp.ne.s32.totalorder %s22, %s23
    %p37 = scmp.eq.s32.totalorder %s15, 1
    %p38 = por %p36, %p37
    %p40 = scmp.ne.s32.totalorder %s23, %s39
    %p41 = scmp.eq.s32.totalorder %s15, 0
    %p42 = por %p40, %p41
    %s44 = sadd.s32 %s43, 1
    %p47 = scmp.eq.s32.totalorder %s9, 1
    %p48 = scmp.ne.s32.totalorder %s43, %s45
    %p49 = scmp.eq.s32.totalorder %s9, 0
    %p50 = por %p48, %p49
    %p51 = scmp.ne.s32.totalorder %s43, %s45
    %p52 = scmp.eq.s32.totalorder %s14, 1
    %p53 = por %p51, %p52
    %p54 = scmp.ne.s32.totalorder %s45, %s46
    %p55 = scmp.eq.s32.totalorder %s14, 0
    %p56 = por %p54, %p55
    %p57 = scmp.ne.s32.totalorder %s45, %s46
    %p58 = scmp.eq.s32.totalorder %s15, 1
    %p59 = por %p57, %p58
    %p61 = scmp.ne.s32.totalorder %s46, %s60
    %p62 = scmp.eq.s32.totalorder %s15, 0
    %p63 = por %p61, %p62
    %s65 = sadd.s32 %s64, 1
    %p68 = scmp.eq.s32.totalorder %s9, 1
    %p69 = scmp.ne.s32.totalorder %s64, %s66
    %p70 = scmp.eq.s32.totalorder %s9, 0
    %p71 = por %p69, %p70
    %p72 = scmp.ne.s32.totalorder %s64, %s66
    %p73 = scmp.eq.s32.totalorder %s14, 1
    %p74 = por %p72, %p73
    %p75 = scmp.ne.s32.totalorder %s66, %s67
    %p76 = scmp.eq.s32.totalorder %s14, 0
    %p77 = por %p75, %p76
    %p78 = scmp.ne.s32.totalorder %s66, %s67
    %p79 = scmp.eq.s32.totalorder %s15, 1
    %p80 = por %p78, %p79
    %p82 = scmp.ne.s32.totalorder %s67, %s81
    %p83 = scmp.eq.s32.totalorder %s15, 0
    %p84 = por %p82, %p83
    %s85 = ssub.s32 %s9, %s16
    %p86 = scmp.eq.s32.totalorder %s85, 0
    %s88 = sadd.s32 %s87, 1
    %s89 = scalar_select %p86, %s87, %s88
    %p92 = pneg %p86
    %p93 = scmp.eq.s32.totalorder %s9, 1
    %p94 = por %p92, %p93
    %p95 = scmp.ne.s32.totalorder %s87, %s90
    %p96 = scmp.eq.s32.totalorder %s9, 0
    %p97 = por %p95, %p96
    %p98 = scmp.ne.s32.totalorder %s87, %s90
    %p99 = scmp.eq.s32.totalorder %s14, 1
    %p100 = por %p98, %p99
    %p101 = scmp.ne.s32.totalorder %s90, %s91
    %p102 = scmp.eq.s32.totalorder %s14, 0
    %p103 = por %p101, %p102
    %p104 = scmp.ne.s32.totalorder %s90, %s91
    %p105 = scmp.eq.s32.totalorder %s15, 1
    %p106 = por %p104, %p105
    %p108 = scmp.ne.s32.totalorder %s91, %s107
    %p109 = scmp.eq.s32.totalorder %s15, 0
    %p110 = por %p108, %p109
    %p111 = scmp.le.s32.totalorder 1, %s9
    %p112 = scmp.lt.s32.totalorder %s9, 3
    %p113 = pnand %p111, %p112
    %p114 = pneg %p113
    // Predicated region
    $region9: #{cnnblock_forward.3} parent=5 // pred_check
      _
    $region10: #{cnnblock_forward.3} parent=5 // pred_check_branch
      %116 = sbr.rel (%p113) target = $region12
    $region11: #{cnnblock_forward.3} parent=5 // pred_region
      %s117 = ssub.s32 %s9, 1
      // Predicated region
      $region13: #{cnnblock_forward.3} parent=11 // pred_check
        %p118 = pneg %p56
      $region14: #{cnnblock_forward.3} parent=11 // pred_check_branch
        %120 = sbr.rel (%p118) target = $region16
      $region15: #{cnnblock_forward.3} parent=11 // pred_region
        _
      $region16: #{cnnblock_forward.3} parent=11 // pred_fallthru
        _
      // Predicated region
      $region17: #{cnnblock_forward.3} parent=11 // pred_check
        %p121 = pneg %p77
      $region18: #{cnnblock_forward.3} parent=11 // pred_check_branch
        %123 = sbr.rel (%p121) target = $region20
      $region19: #{cnnblock_forward.3} parent=11 // pred_region
        _
      $region20: #{cnnblock_forward.3} parent=11 // pred_fallthru
        _
    $region12: #{cnnblock_forward.3} parent=5 // pred_fallthru
      _
    %p124 = scmp.lt.s32.totalorder %s9, 2
    // Predicated region
    $region21: #{cnnblock_forward.3} parent=5 // pred_check
      %p125 = pneg %p124
    $region22: #{cnnblock_forward.3} parent=5 // pred_check_branch
      %127 = sbr.rel (%p125) target = $region24
    $region23: #{cnnblock_forward.3} parent=5 // pred_region
      // Predicated region
      $region25: #{cnnblock_forward.3} parent=23 // pred_check
        %p128 = pneg %p29
      $region26: #{cnnblock_forward.3} parent=23 // pred_check_branch
        %130 = sbr.rel (%p128) target = $region28
      $region27: #{cnnblock_forward.3} parent=23 // pred_region
        %s131 = smul.u32 32, %s9
        %p132 = scmp.lt.s32.totalorder %s131, 63
        %s133 = scalar_select %p132, %s131, 63
        %s134 = smul.addr %s133, 8
        %s135 = scalar_lea.vmem %s0, %s134
        %s136 = smul.u32 32, %s9
      $region28: #{cnnblock_forward.3} parent=23 // pred_fallthru
        _
    $region24: #{cnnblock_forward.3} parent=5 // pred_fallthru
      _
    %p137 = scmp.le.s32.totalorder 1, %s9
    %p138 = scmp.lt.s32.totalorder %s9, 3
    %p139 = pnand %p137, %p138
    %p140 = pneg %p139
    // Predicated region
    $region29: #{cnnblock_forward.3} parent=5 // pred_check
      _
    $region30: #{cnnblock_forward.3} parent=5 // pred_check_branch
      %142 = sbr.rel (%p139) target = $region32
    $region31: #{cnnblock_forward.3} parent=5 // pred_region
      %s143 = ssub.s32 %s9, 1
      %s144 = smul.u32 32, %s14
      %p145 = scmp.lt.s32.totalorder %s144, 63
      %s146 = scalar_select %p145, %s144, 63
      %s147 = smul.addr %s146, 8
      %s148 = scalar_lea.vmem %s0, %s147
      %p149 = pneg %p35
      %p150 = pneg %p32
      %p151 = pneg %p56
      %p152 = pneg %p53
      %p153 = pneg %p77
      %p154 = pneg %p74
      %p155 = pneg %p103
      %p156 = pneg %p100
      %s157 = smul.u32 32, %s14
      %p158 = scmp.lt.s32.totalorder %s157, 63
      %s159 = scalar_select %p158, %s157, 63
      %s160 = smul.addr %s159, 8
      %s161 = scalar_lea.vmem %s3, %s160
      %s162 = smul.u32 32, %s14
      %p163 = scmp.lt.s32.totalorder %s162, 63
      %s164 = scalar_select %p163, %s162, 63
      %s165 = smul.addr %s164, 8
      %s166 = scalar_lea.vmem %s0, %s165
      %s167 = smul.u32 32, %s14
      %s168 = smul.u32 32, %s14
      %p169 = scmp.lt.s32.totalorder %s168, 63
      %s170 = scalar_select %p169, %s168, 63
      %s171 = smul.addr %s170, 8
      %s172 = scalar_lea.vmem %s3, %s171
      %s173 = smul.u32 32, %s14
      %v174 = vld [vmem:[%s166] sm:$0xff]
      %v175 = vld [vmem:[%s166 + $0x8] sm:$0xff]
      %v176 = vld [vmem:[%s166 + $0x10] sm:$0xff]
      %v177 = vld [vmem:[%s166 + $0x18] sm:$0xff]
      %v178 = vld [vmem:[%s166 + $0x20] sm:$0xff]
      %v179 = vld [vmem:[%s166 + $0x28] sm:$0xff]
      %v180 = vld [vmem:[%s166 + $0x30] sm:$0xff]
      %v181 = vld [vmem:[%s166 + $0x38] sm:$0xff]
      %v182 = vld [vmem:[%s166 + $0x40] sm:$0xff]
      %v183 = vld [vmem:[%s166 + $0x48] sm:$0xff]
      %v184 = vld [vmem:[%s166 + $0x50] sm:$0xff]
      %v185 = vld [vmem:[%s166 + $0x58] sm:$0xff]
      %v186 = vld [vmem:[%s166 + $0x60] sm:$0xff]
      %v187 = vld [vmem:[%s166 + $0x68] sm:$0xff]
      %v188 = vld [vmem:[%s166 + $0x70] sm:$0xff]
      %v189 = vld [vmem:[%s166 + $0x78] sm:$0xff]
      %v190 = vld [vmem:[%s166 + $0x80] sm:$0xff]
      %v191 = vld [vmem:[%s166 + $0x88] sm:$0xff]
      %v192 = vld [vmem:[%s166 + $0x90] sm:$0xff]
      %v193 = vld [vmem:[%s166 + $0x98] sm:$0xff]
      %v194 = vld [vmem:[%s166 + $0xa0] sm:$0xff]
      %v195 = vld [vmem:[%s166 + $0xa8] sm:$0xff]
      %v196 = vld [vmem:[%s166 + $0xb0] sm:$0xff]
      %v197 = vld [vmem:[%s166 + $0xb8] sm:$0xff]
      %v198 = vld [vmem:[%s166 + $0xc0] sm:$0xff]
      %v199 = vld [vmem:[%s166 + $0xc8] sm:$0xff]
      %v200 = vld [vmem:[%s166 + $0xd0] sm:$0xff]
      %v201 = vld [vmem:[%s166 + $0xd8] sm:$0xff]
      %v202 = vld [vmem:[%s166 + $0xe0] sm:$0xff]
      %v203 = vld [vmem:[%s166 + $0xe8] sm:$0xff]
      %v204 = vld [vmem:[%s166 + $0xf0] sm:$0xff]
      %v205 = vld [vmem:[%s166 + $0xf8] sm:$0xff]
      %v206 = vld [vmem:[%s1] sm:$0x1]
      %v208 = vperm.slane %v206, 0
      %v210 = vmul.f32 %v174, %v208
      %v211 = vmul.f32 %v175, %v208
      %v212 = vmul.f32 %v176, %v208
      %v213 = vmul.f32 %v177, %v208
      %v214 = vmul.f32 %v178, %v208
      %v215 = vmul.f32 %v179, %v208
      %v216 = vmul.f32 %v180, %v208
      %v217 = vmul.f32 %v181, %v208
      %v218 = vmul.f32 %v182, %v208
      %v219 = vmul.f32 %v183, %v208
      %v220 = vmul.f32 %v184, %v208
      %v221 = vmul.f32 %v185, %v208
      %v222 = vmul.f32 %v186, %v208
      %v223 = vmul.f32 %v187, %v208
      %v224 = vmul.f32 %v188, %v208
      %v225 = vmul.f32 %v189, %v208
      %v226 = vmul.f32 %v190, %v208
      %v227 = vmul.f32 %v191, %v208
      %v228 = vmul.f32 %v192, %v208
      %v229 = vmul.f32 %v193, %v208
      %v230 = vmul.f32 %v194, %v208
      %v231 = vmul.f32 %v195, %v208
      %v232 = vmul.f32 %v196, %v208
      %v233 = vmul.f32 %v197, %v208
      %v234 = vmul.f32 %v198, %v208
      %v235 = vmul.f32 %v199, %v208
      %v236 = vmul.f32 %v200, %v208
      %v237 = vmul.f32 %v201, %v208
      %v238 = vmul.f32 %v202, %v208
      %v239 = vmul.f32 %v203, %v208
      %v240 = vmul.f32 %v204, %v208
      %v241 = vmul.f32 %v205, %v208
      %v242 = vld [vmem:[%s2] sm:$0x1]
      %v244 = vperm.slane %v242, 0
      %v246 = vadd.f32 %v210, %v244
      %v247 = vadd.f32 %v211, %v244
      %v248 = vadd.f32 %v212, %v244
      %v249 = vadd.f32 %v213, %v244
      %v250 = vadd.f32 %v214, %v244
      %v251 = vadd.f32 %v215, %v244
      %v252 = vadd.f32 %v216, %v244
      %v253 = vadd.f32 %v217, %v244
      %v254 = vadd.f32 %v218, %v244
      %v255 = vadd.f32 %v219, %v244
      %v256 = vadd.f32 %v220, %v244
      %v257 = vadd.f32 %v221, %v244
      %v258 = vadd.f32 %v222, %v244
      %v259 = vadd.f32 %v223, %v244
      %v260 = vadd.f32 %v224, %v244
      %v261 = vadd.f32 %v225, %v244
      %v262 = vadd.f32 %v226, %v244
      %v263 = vadd.f32 %v227, %v244
      %v264 = vadd.f32 %v228, %v244
      %v265 = vadd.f32 %v229, %v244
      %v266 = vadd.f32 %v230, %v244
      %v267 = vadd.f32 %v231, %v244
      %v268 = vadd.f32 %v232, %v244
      %v269 = vadd.f32 %v233, %v244
      %v270 = vadd.f32 %v234, %v244
      %v271 = vadd.f32 %v235, %v244
      %v272 = vadd.f32 %v236, %v244
      %v273 = vadd.f32 %v237, %v244
      %v274 = vadd.f32 %v238, %v244
      %v275 = vadd.f32 %v239, %v244
      %v276 = vadd.f32 %v240, %v244
      %v277 = vadd.f32 %v241, %v244
      %vm278 = vcmp.gt.f32.partialorder %v246, 0.0
      %vm279 = vcmp.gt.f32.partialorder %v247, 0.0
      %vm280 = vcmp.gt.f32.partialorder %v248, 0.0
      %vm281 = vcmp.gt.f32.partialorder %v249, 0.0
      %vm282 = vcmp.gt.f32.partialorder %v250, 0.0
      %vm283 = vcmp.gt.f32.partialorder %v251, 0.0
      %vm284 = vcmp.gt.f32.partialorder %v252, 0.0
      %vm285 = vcmp.gt.f32.partialorder %v253, 0.0
      %vm286 = vcmp.gt.f32.partialorder %v254, 0.0
      %vm287 = vcmp.gt.f32.partialorder %v255, 0.0
      %vm288 = vcmp.gt.f32.partialorder %v256, 0.0
      %vm289 = vcmp.gt.f32.partialorder %v257, 0.0
      %vm290 = vcmp.gt.f32.partialorder %v258, 0.0
      %vm291 = vcmp.gt.f32.partialorder %v259, 0.0
      %vm292 = vcmp.gt.f32.partialorder %v260, 0.0
      %vm293 = vcmp.gt.f32.partialorder %v261, 0.0
      %vm294 = vcmp.gt.f32.partialorder %v262, 0.0
      %vm295 = vcmp.gt.f32.partialorder %v263, 0.0
      %vm296 = vcmp.gt.f32.partialorder %v264, 0.0
      %vm297 = vcmp.gt.f32.partialorder %v265, 0.0
      %vm298 = vcmp.gt.f32.partialorder %v266, 0.0
      %vm299 = vcmp.gt.f32.partialorder %v267, 0.0
      %vm300 = vcmp.gt.f32.partialorder %v268, 0.0
      %vm301 = vcmp.gt.f32.partialorder %v269, 0.0
      %vm302 = vcmp.gt.f32.partialorder %v270, 0.0
      %vm303 = vcmp.gt.f32.partialorder %v271, 0.0
      %vm304 = vcmp.gt.f32.partialorder %v272, 0.0
      %vm305 = vcmp.gt.f32.partialorder %v273, 0.0
      %vm306 = vcmp.gt.f32.partialorder %v274, 0.0
      %vm307 = vcmp.gt.f32.partialorder %v275, 0.0
      %vm308 = vcmp.gt.f32.partialorder %v276, 0.0
      %vm309 = vcmp.gt.f32.partialorder %v277, 0.0
      %v310 = vmul.f32 %v246, 0.1
      %v311 = vmul.f32 %v247, 0.1
      %v312 = vmul.f32 %v248, 0.1
      %v313 = vmul.f32 %v249, 0.1
      %v314 = vmul.f32 %v250, 0.1
      %v315 = vmul.f32 %v251, 0.1
      %v316 = vmul.f32 %v252, 0.1
      %v317 = vmul.f32 %v253, 0.1
      %v318 = vmul.f32 %v254, 0.1
      %v319 = vmul.f32 %v255, 0.1
      %v320 = vmul.f32 %v256, 0.1
      %v321 = vmul.f32 %v257, 0.1
      %v322 = vmul.f32 %v258, 0.1
      %v323 = vmul.f32 %v259, 0.1
      %v324 = vmul.f32 %v260, 0.1
      %v325 = vmul.f32 %v261, 0.1
      %v326 = vmul.f32 %v262, 0.1
      %v327 = vmul.f32 %v263, 0.1
      %v328 = vmul.f32 %v264, 0.1
      %v329 = vmul.f32 %v265, 0.1
      %v330 = vmul.f32 %v266, 0.1
      %v331 = vmul.f32 %v267, 0.1
      %v332 = vmul.f32 %v268, 0.1
      %v333 = vmul.f32 %v269, 0.1
      %v334 = vmul.f32 %v270, 0.1
      %v335 = vmul.f32 %v271, 0.1
      %v336 = vmul.f32 %v272, 0.1
      %v337 = vmul.f32 %v273, 0.1
      %v338 = vmul.f32 %v274, 0.1
      %v339 = vmul.f32 %v275, 0.1
      %v340 = vmul.f32 %v276, 0.1
      %v341 = vmul.f32 %v277, 0.1
      %v342 = vsel %vm278, %v246, %v310
      %v343 = vsel %vm279, %v247, %v311
      %v344 = vsel %vm280, %v248, %v312
      %v345 = vsel %vm281, %v249, %v313
      %v346 = vsel %vm282, %v250, %v314
      %v347 = vsel %vm283, %v251, %v315
      %v348 = vsel %vm284, %v252, %v316
      %v349 = vsel %vm285, %v253, %v317
      %v350 = vsel %vm286, %v254, %v318
      %v351 = vsel %vm287, %v255, %v319
      %v352 = vsel %vm288, %v256, %v320
      %v353 = vsel %vm289, %v257, %v321
      %v354 = vsel %vm290, %v258, %v322
      %v355 = vsel %vm291, %v259, %v323
      %v356 = vsel %vm292, %v260, %v324
      %v357 = vsel %vm293, %v261, %v325
      %v358 = vsel %vm294, %v262, %v326
      %v359 = vsel %vm295, %v263, %v327
      %v360 = vsel %vm296, %v264, %v328
      %v361 = vsel %vm297, %v265, %v329
      %v362 = vsel %vm298, %v266, %v330
      %v363 = vsel %vm299, %v267, %v331
      %v364 = vsel %vm300, %v268, %v332
      %v365 = vsel %vm301, %v269, %v333
      %v366 = vsel %vm302, %v270, %v334
      %v367 = vsel %vm303, %v271, %v335
      %v368 = vsel %vm304, %v272, %v336
      %v369 = vsel %vm305, %v273, %v337
      %v370 = vsel %vm306, %v274, %v338
      %v371 = vsel %vm307, %v275, %v339
      %v372 = vsel %vm308, %v276, %v340
      %v373 = vsel %vm309, %v277, %v341
      %374 = vst [vmem:[%s172] sm:$0xff] %v342
      %375 = vst [vmem:[%s172 + $0x8] sm:$0xff] %v343
      %376 = vst [vmem:[%s172 + $0x10] sm:$0xff] %v344
      %377 = vst [vmem:[%s172 + $0x18] sm:$0xff] %v345
      %378 = vst [vmem:[%s172 + $0x20] sm:$0xff] %v346
      %379 = vst [vmem:[%s172 + $0x28] sm:$0xff] %v347
      %380 = vst [vmem:[%s172 + $0x30] sm:$0xff] %v348
      %381 = vst [vmem:[%s172 + $0x38] sm:$0xff] %v349
      %382 = vst [vmem:[%s172 + $0x40] sm:$0xff] %v350
      %383 = vst [vmem:[%s172 + $0x48] sm:$0xff] %v351
      %384 = vst [vmem:[%s172 + $0x50] sm:$0xff] %v352
      %385 = vst [vmem:[%s172 + $0x58] sm:$0xff] %v353
      %386 = vst [vmem:[%s172 + $0x60] sm:$0xff] %v354
      %387 = vst [vmem:[%s172 + $0x68] sm:$0xff] %v355
      %388 = vst [vmem:[%s172 + $0x70] sm:$0xff] %v356
      %389 = vst [vmem:[%s172 + $0x78] sm:$0xff] %v357
      %390 = vst [vmem:[%s172 + $0x80] sm:$0xff] %v358
      %391 = vst [vmem:[%s172 + $0x88] sm:$0xff] %v359
      %392 = vst [vmem:[%s172 + $0x90] sm:$0xff] %v360
      %393 = vst [vmem:[%s172 + $0x98] sm:$0xff] %v361
      %394 = vst [vmem:[%s172 + $0xa0] sm:$0xff] %v362
      %395 = vst [vmem:[%s172 + $0xa8] sm:$0xff] %v363
      %396 = vst [vmem:[%s172 + $0xb0] sm:$0xff] %v364
      %397 = vst [vmem:[%s172 + $0xb8] sm:$0xff] %v365
      %398 = vst [vmem:[%s172 + $0xc0] sm:$0xff] %v366
      %399 = vst [vmem:[%s172 + $0xc8] sm:$0xff] %v367
      %400 = vst [vmem:[%s172 + $0xd0] sm:$0xff] %v368
      %401 = vst [vmem:[%s172 + $0xd8] sm:$0xff] %v369
      %402 = vst [vmem:[%s172 + $0xe0] sm:$0xff] %v370
      %403 = vst [vmem:[%s172 + $0xe8] sm:$0xff] %v371
      %404 = vst [vmem:[%s172 + $0xf0] sm:$0xff] %v372
      %405 = vst [vmem:[%s172 + $0xf8] sm:$0xff] %v373
      %s406 = smul.u32 32, %s14
      %p407 = scmp.lt.s32.totalorder %s406, 63
      %s408 = scalar_select %p407, %s406, 63
      %s409 = smul.addr %s408, 8
      %s410 = scalar_lea.vmem %s3, %s409
      // Predicated region
      $region33: #{cnnblock_forward.3} parent=31 // pred_check
        %p411 = pneg %p100
      $region34: #{cnnblock_forward.3} parent=31 // pred_check_branch
        %413 = sbr.rel (%p411) target = $region36
      $region35: #{cnnblock_forward.3} parent=31 // pred_region
        %s414 = smul.u32 32, %s14
      $region36: #{cnnblock_forward.3} parent=31 // pred_fallthru
        _
    $region32: #{cnnblock_forward.3} parent=5 // pred_fallthru
      _
    %p415 = scmp.le.s32.totalorder 2, %s9
    // Predicated region
    $region37: #{cnnblock_forward.3} parent=5 // pred_check
      %p416 = pneg %p415
    $region38: #{cnnblock_forward.3} parent=5 // pred_check_branch
      %418 = sbr.rel (%p416) target = $region40
    $region39: #{cnnblock_forward.3} parent=5 // pred_region
      %s419 = ssub.s32 %s9, 2
      // Predicated region
      $region41: #{cnnblock_forward.3} parent=39 // pred_check
        %p420 = pneg %p106
      $region42: #{cnnblock_forward.3} parent=39 // pred_check_branch
        %422 = sbr.rel (%p420) target = $region44
      $region43: #{cnnblock_forward.3} parent=39 // pred_region
        %s423 = smul.u32 32, %s15
        %p424 = scmp.lt.s32.totalorder %s423, 63
        %s425 = scalar_select %p424, %s423, 63
        %s426 = smul.addr %s425, 8
        %s427 = scalar_lea.vmem %s3, %s426
      $region44: #{cnnblock_forward.3} parent=39 // pred_fallthru
        _
    $region40: #{cnnblock_forward.3} parent=5 // pred_fallthru
      _
  $region6: #{cnnblock_forward.3} parent=0 // loop_footer
    %s13 = sadd.s32 1, %s9
  $region7: #{cnnblock_forward.3} parent=0 // loop_footer_branch
    %8 = sbr.rel target = $region3
  $region8: #{cnnblock_forward.3} parent=0 // loop_exit
    _

// kernel: cnnblock_forward.2
$region0: #{cnnblock_forward.2}
  #allocation0 [shape = 'u32[]', space=smem, size = 0x4, offset = 0x4, fixed_abs, tag = 'smem constant byte address 0x4 - core index']
  #allocation1 [shape = 'u32[72,128]{1,0:T(1,128)}', space=vmem, size = 0x9000, scoped, tag = 'internal scratch']
  %s0 = inlined_call_operand.vmem [shape: f32[512,27], index: 0, kind: input, shape index: {}]
  %s1 = inlined_call_operand.vmem [shape: f32[27,128], index: 1, kind: input, shape index: {}]
  %s2 = inlined_call_operand.vmem [shape: f32[512,128], index: 2, kind: output, shape index: {0}]
  %s3 = inlined_call_operand.vmem [shape: f32[2,2,128], index: 3, kind: output, shape index: {1}]
  %4 = xla_tuple %s2, %s3
  %s5 = sld [smem:[#allocation0]]
  $region49: #{cnnblock_forward.2} parent=0
    _
  %s7 = ssub.s32 1, %s5
  %s8 = scalar_select 0, %s7, %s5
  loop: start=0, step=1, limit=4
  $region2: #{cnnblock_forward.2} parent=0 // loop_pre_header
    _
  $region3: #{cnnblock_forward.2} parent=0 // loop_header
    %s10 = sphi 0, %s14
    %p11 = scmp.ge.s32.totalorder %s10, 4
    %s20 = sphi 0, %s22
    %s23 = sphi 0, %s20
    %s24 = sphi 0, %s23
    %s40 = sphi 0, %s24
    %s44 = sphi 0, %s44
    %s46 = sphi 0, %s44
    %s47 = sphi 0, %s46
    %s61 = sphi 0, %s47
    %s67 = sphi 0, %s69
    %s70 = sphi 0, %s67
    %s71 = sphi 0, %s70
    %s87 = sphi 0, %s71
    %s93 = sphi 0, %s95
    %s96 = sphi 0, %s93
    %s97 = sphi 0, %s96
    %s113 = sphi 0, %s97
  $region4: #{cnnblock_forward.2} parent=0 // loop_header_branch
    %13 = sbr.rel (%p11) target = $region8
  $region5: #{cnnblock_forward.2} parent=0 // loop_body
    %s15 = ssub.s32 %s10, 1
    %s16 = ssub.s32 %s10, 2
    %s17 = sadd.s32 %s10, 1
    %s18 = ssub.s32 %s10, %s17
    %p19 = scmp.eq.s32.totalorder %s18, 0
    %s21 = sadd.s32 %s20, 1
    %s22 = scalar_select %p19, %s20, %s21
    %p25 = pneg %p19
    %p26 = scmp.eq.s32.totalorder %s10, 1
    %p27 = por %p25, %p26
    %p28 = scmp.ne.s32.totalorder %s20, %s23
    %p29 = scmp.eq.s32.totalorder %s10, 0
    %p30 = por %p28, %p29
    %p31 = scmp.ne.s32.totalorder %s20, %s23
    %p32 = scmp.eq.s32.totalorder %s15, 1
    %p33 = por %p31, %p32
    %p34 = scmp.ne.s32.totalorder %s23, %s24
    %p35 = scmp.eq.s32.totalorder %s15, 0
    %p36 = por %p34, %p35
    %p37 = scmp.ne.s32.totalorder %s23, %s24
    %p38 = scmp.eq.s32.totalorder %s16, 1
    %p39 = por %p37, %p38
    %p41 = scmp.ne.s32.totalorder %s24, %s40
    %p42 = scmp.eq.s32.totalorder %s16, 0
    %p43 = por %p41, %p42
    %s45 = sadd.s32 %s44, 1
    %p48 = scmp.eq.s32.totalorder %s10, 1
    %p49 = scmp.ne.s32.totalorder %s44, %s46
    %p50 = scmp.eq.s32.totalorder %s10, 0
    %p51 = por %p49, %p50
    %p52 = scmp.ne.s32.totalorder %s44, %s46
    %p53 = scmp.eq.s32.totalorder %s15, 1
    %p54 = por %p52, %p53
    %p55 = scmp.ne.s32.totalorder %s46, %s47
    %p56 = scmp.eq.s32.totalorder %s15, 0
    %p57 = por %p55, %p56
    %p58 = scmp.ne.s32.totalorder %s46, %s47
    %p59 = scmp.eq.s32.totalorder %s16, 1
    %p60 = por %p58, %p59
    %p62 = scmp.ne.s32.totalorder %s47, %s61
    %p63 = scmp.eq.s32.totalorder %s16, 0
    %p64 = por %p62, %p63
    %s65 = ssub.s32 %s10, %s17
    %p66 = scmp.eq.s32.totalorder %s65, 0
    %s68 = sadd.s32 %s67, 1
    %s69 = scalar_select %p66, %s67, %s68
    %p72 = pneg %p66
    %p73 = scmp.eq.s32.totalorder %s10, 1
    %p74 = por %p72, %p73
    %p75 = scmp.ne.s32.totalorder %s67, %s70
    %p76 = scmp.eq.s32.totalorder %s10, 0
    %p77 = por %p75, %p76
    %p78 = scmp.ne.s32.totalorder %s67, %s70
    %p79 = scmp.eq.s32.totalorder %s15, 1
    %p80 = por %p78, %p79
    %p81 = scmp.ne.s32.totalorder %s70, %s71
    %p82 = scmp.eq.s32.totalorder %s15, 0
    %p83 = por %p81, %p82
    %p84 = scmp.ne.s32.totalorder %s70, %s71
    %p85 = scmp.eq.s32.totalorder %s16, 1
    %p86 = por %p84, %p85
    %p88 = scmp.ne.s32.totalorder %s71, %s87
    %p89 = scmp.eq.s32.totalorder %s16, 0
    %p90 = por %p88, %p89
    %s91 = ssub.s32 %s10, %s17
    %p92 = scmp.eq.s32.totalorder %s91, 0
    %s94 = sadd.s32 %s93, 1
    %s95 = scalar_select %p92, %s93, %s94
    %p98 = pneg %p92
    %p99 = scmp.eq.s32.totalorder %s10, 1
    %p100 = por %p98, %p99
    %p101 = scmp.ne.s32.totalorder %s93, %s96
    %p102 = scmp.eq.s32.totalorder %s10, 0
    %p103 = por %p101, %p102
    %p104 = scmp.ne.s32.totalorder %s93, %s96
    %p105 = scmp.eq.s32.totalorder %s15, 1
    %p106 = por %p104, %p105
    %p107 = scmp.ne.s32.totalorder %s96, %s97
    %p108 = scmp.eq.s32.totalorder %s15, 0
    %p109 = por %p107, %p108
    %p110 = scmp.ne.s32.totalorder %s96, %s97
    %p111 = scmp.eq.s32.totalorder %s16, 1
    %p112 = por %p110, %p111
    %p114 = scmp.ne.s32.totalorder %s97, %s113
    %p115 = scmp.eq.s32.totalorder %s16, 0
    %p116 = por %p114, %p115
    %p117 = scmp.le.s32.totalorder 1, %s10
    %p118 = scmp.lt.s32.totalorder %s10, 3
    %p119 = pnand %p117, %p118
    %p120 = pneg %p119
    // Predicated region
    $region9: #{cnnblock_forward.2} parent=5 // pred_check
      _
    $region10: #{cnnblock_forward.2} parent=5 // pred_check_branch
      %122 = sbr.rel (%p119) target = $region12
    $region11: #{cnnblock_forward.2} parent=5 // pred_region
      %s123 = ssub.s32 %s10, 1
      // Predicated region
      $region13: #{cnnblock_forward.2} parent=11 // pred_check
        %p124 = pneg %p57
      $region14: #{cnnblock_forward.2} parent=11 // pred_check_branch
        %126 = sbr.rel (%p124) target = $region16
      $region15: #{cnnblock_forward.2} parent=11 // pred_region
        _
      $region16: #{cnnblock_forward.2} parent=11 // pred_fallthru
        _
    $region12: #{cnnblock_forward.2} parent=5 // pred_fallthru
      _
    %p127 = scmp.lt.s32.totalorder %s10, 2
    // Predicated region
    $region17: #{cnnblock_forward.2} parent=5 // pred_check
      %p128 = pneg %p127
    $region18: #{cnnblock_forward.2} parent=5 // pred_check_branch
      %130 = sbr.rel (%p128) target = $region20
    $region19: #{cnnblock_forward.2} parent=5 // pred_region
      // Predicated region
      $region21: #{cnnblock_forward.2} parent=19 // pred_check
        %p131 = pneg %p30
      $region22: #{cnnblock_forward.2} parent=19 // pred_check_branch
        %133 = sbr.rel (%p131) target = $region24
      $region23: #{cnnblock_forward.2} parent=19 // pred_region
        %s134 = smul.u32 32, %s10
        %p135 = scmp.lt.s32.totalorder %s134, 63
        %s136 = scalar_select %p135, %s134, 63
        %s137 = smul.addr %s136, 8
        %s138 = scalar_lea.vmem %s0, %s137
        %s139 = smul.u32 32, %s10
      $region24: #{cnnblock_forward.2} parent=19 // pred_fallthru
        _
    $region20: #{cnnblock_forward.2} parent=5 // pred_fallthru
      _
    %p140 = scmp.le.s32.totalorder 1, %s10
    %p141 = scmp.lt.s32.totalorder %s10, 3
    %p142 = pnand %p140, %p141
    %p143 = pneg %p142
    // Predicated region
    $region25: #{cnnblock_forward.2} parent=5 // pred_check
      _
    $region26: #{cnnblock_forward.2} parent=5 // pred_check_branch
      %145 = sbr.rel (%p142) target = $region28
    $region27: #{cnnblock_forward.2} parent=5 // pred_region
      %s146 = ssub.s32 %s10, 1
      %s147 = smul.u32 32, %s15
      %p148 = scmp.lt.s32.totalorder %s147, 63
      %s149 = scalar_select %p148, %s147, 63
      %s150 = smul.addr %s149, 8
      %s151 = scalar_lea.vmem %s0, %s150
      %p152 = pneg %p36
      %p153 = pneg %p33
      %p154 = pneg %p57
      %p155 = pneg %p54
      %p156 = pneg %p83
      %p157 = pneg %p80
      %s158 = smul.u32 32, %s15
      %p159 = scmp.lt.s32.totalorder %s158, 63
      %s160 = scalar_select %p159, %s158, 63
      %s161 = smul.addr %s160, 8
      %s162 = scalar_lea.vmem %s2, %s161
      %p163 = pneg %p109
      %p164 = pneg %p106
      %p165 = scmp.lt.s32.totalorder %s15, 1
      %s166 = scalar_select %p165, %s15, 1
      %s167 = smul.addr %s166, 2
      %s168 = scalar_lea.vmem %s3, %s167
      %s169 = smul.u32 32, %s15
      %p170 = scmp.lt.s32.totalorder %s169, 63
      %s171 = scalar_select %p170, %s169, 63
      %s172 = smul.addr %s171, 8
      %s173 = scalar_lea.vmem %s0, %s172
      %s174 = smul.u32 32, %s15
      %s175 = smul.u32 32, %s15
      %p176 = scmp.lt.s32.totalorder %s175, 63
      %s177 = scalar_select %p176, %s175, 63
      %s178 = smul.addr %s177, 8
      %s179 = scalar_lea.vmem %s2, %s178
      %s180 = smul.u32 32, %s15
      %p181 = scmp.lt.s32.totalorder %s15, 1
      %s182 = scalar_select %p181, %s15, 1
      %s183 = smul.addr %s182, 2
      %s184 = scalar_lea.vmem %s3, %s183
      %v185 = vld [vmem:[%s173] sm:$0xff]
      %v186 = vld [vmem:[%s173 + $0x8] sm:$0xff]
      %v187 = vld [vmem:[%s173 + $0x10] sm:$0xff]
      %v188 = vld [vmem:[%s173 + $0x18] sm:$0xff]
      %v189 = vld [vmem:[%s173 + $0x20] sm:$0xff]
      %v190 = vld [vmem:[%s173 + $0x28] sm:$0xff]
      %v191 = vld [vmem:[%s173 + $0x30] sm:$0xff]
      %v192 = vld [vmem:[%s173 + $0x38] sm:$0xff]
      %v193 = vld [vmem:[%s173 + $0x40] sm:$0xff]
      %v194 = vld [vmem:[%s173 + $0x48] sm:$0xff]
      %v195 = vld [vmem:[%s173 + $0x50] sm:$0xff]
      %v196 = vld [vmem:[%s173 + $0x58] sm:$0xff]
      %v197 = vld [vmem:[%s173 + $0x60] sm:$0xff]
      %v198 = vld [vmem:[%s173 + $0x68] sm:$0xff]
      %v199 = vld [vmem:[%s173 + $0x70] sm:$0xff]
      %v200 = vld [vmem:[%s173 + $0x78] sm:$0xff]
      %v201 = vld [vmem:[%s173 + $0x80] sm:$0xff]
      %v202 = vld [vmem:[%s173 + $0x88] sm:$0xff]
      %v203 = vld [vmem:[%s173 + $0x90] sm:$0xff]
      %v204 = vld [vmem:[%s173 + $0x98] sm:$0xff]
      %v205 = vld [vmem:[%s173 + $0xa0] sm:$0xff]
      %v206 = vld [vmem:[%s173 + $0xa8] sm:$0xff]
      %v207 = vld [vmem:[%s173 + $0xb0] sm:$0xff]
      %v208 = vld [vmem:[%s173 + $0xb8] sm:$0xff]
      %v209 = vld [vmem:[%s173 + $0xc0] sm:$0xff]
      %v210 = vld [vmem:[%s173 + $0xc8] sm:$0xff]
      %v211 = vld [vmem:[%s173 + $0xd0] sm:$0xff]
      %v212 = vld [vmem:[%s173 + $0xd8] sm:$0xff]
      %v213 = vld [vmem:[%s173 + $0xe0] sm:$0xff]
      %v214 = vld [vmem:[%s173 + $0xe8] sm:$0xff]
      %v215 = vld [vmem:[%s173 + $0xf0] sm:$0xff]
      %v216 = vld [vmem:[%s173 + $0xf8] sm:$0xff]
      %v217 = vld [vmem:[%s1] sm:$0xff]
      %v218 = vld [vmem:[%s1 + $0x8] sm:$0xff]
      %v219 = vld [vmem:[%s1 + $0x10] sm:$0xff]
      %v220 = vld [vmem:[%s1 + $0x18] sm:$0x7]
      %vm221 = vcmask 220160
      %v223 = vsel %vm221, %v185, 0
      %v226 = vsel %vm221, %v186, 0
      %v229 = vsel %vm221, %v187, 0
      %v232 = vsel %vm221, %v188, 0
      %v235 = vsel %vm221, %v189, 0
      %v238 = vsel %vm221, %v190, 0
      %v241 = vsel %vm221, %v191, 0
      %v244 = vsel %vm221, %v192, 0
      %v247 = vsel %vm221, %v193, 0
      %v250 = vsel %vm221, %v194, 0
      %v253 = vsel %vm221, %v195, 0
      %v256 = vsel %vm221, %v196, 0
      %v259 = vsel %vm221, %v197, 0
      %v262 = vsel %vm221, %v198, 0
      %v265 = vsel %vm221, %v199, 0
      %v268 = vsel %vm221, %v200, 0
      %v271 = vsel %vm221, %v201, 0
      %v274 = vsel %vm221, %v202, 0
      %v277 = vsel %vm221, %v203, 0
      %v280 = vsel %vm221, %v204, 0
      %v283 = vsel %vm221, %v205, 0
      %v286 = vsel %vm221, %v206, 0
      %v289 = vsel %vm221, %v207, 0
      %v292 = vsel %vm221, %v208, 0
      %v295 = vsel %vm221, %v209, 0
      %v298 = vsel %vm221, %v210, 0
      %v301 = vsel %vm221, %v211, 0
      %v304 = vsel %vm221, %v212, 0
      %v307 = vsel %vm221, %v213, 0
      %v310 = vsel %vm221, %v214, 0
      %v313 = vsel %vm221, %v215, 0
      %v316 = vsel %vm221, %v216, 0
      %vm318 = vcmask 1042432
      %v320 = vsel %vm318, %v220, 0
      %322 = vmatpush.msra.mxu0 0.0
      %323 = vmatpush.msra.mxu0 0.0
      %324 = vmatpush.msra.mxu0 0.0
      %325 = vmatpush.msra.mxu0 0.0
      %326 = vmatpush.msra.mxu0 0.0
      %327 = vmatpush.msra.mxu0 0.0
      %328 = vmatpush.msra.mxu0 0.0
      %329 = vmatpush.msra.mxu0 0.0
      %330 = vmatpush.msra.mxu0 0.0
      %331 = vmatpush.msra.mxu0 0.0
      %332 = vmatpush.msra.mxu0 0.0
      %333 = vmatpush.msra.mxu0 0.0
      %334 = vmatpush.msra.mxu0 %v320
      %335 = vmatpush.msra.mxu0 %v219
      %336 = vmatpush.msra.mxu0 %v218
      %337 = vmatpush.msra.mxu0 %v217
      %338 = vmatmul.f32.gmra.mxu0 %v223
      %v339 = vpop.f32.mrf.mxu0
      %v340 = vadd.f32 0.0, %v339
      %341 = vmatmul.f32.gmra.mxu0 %v226
      %v342 = vpop.f32.mrf.mxu0
      %v343 = vadd.f32 0.0, %v342
      %344 = vmatmul.f32.gmra.mxu0 %v229
      %v345 = vpop.f32.mrf.mxu0
      %v346 = vadd.f32 0.0, %v345
      %347 = vmatmul.f32.gmra.mxu0 %v232
      %v348 = vpop.f32.mrf.mxu0
      %v349 = vadd.f32 0.0, %v348
      %350 = vmatmul.f32.gmra.mxu0 %v235
      %v351 = vpop.f32.mrf.mxu0
      %v352 = vadd.f32 0.0, %v351
      %353 = vmatmul.f32.gmra.mxu0 %v238
      %v354 = vpop.f32.mrf.mxu0
      %v355 = vadd.f32 0.0, %v354
      %356 = vmatmul.f32.gmra.mxu0 %v241
      %v357 = vpop.f32.mrf.mxu0
      %v358 = vadd.f32 0.0, %v357
      %359 = vmatmul.f32.gmra.mxu0 %v244
      %v360 = vpop.f32.mrf.mxu0
      %v361 = vadd.f32 0.0, %v360
      %362 = vmatmul.f32.gmra.mxu0 %v247
      %v363 = vpop.f32.mrf.mxu0
      %v364 = vadd.f32 0.0, %v363
      %365 = vmatmul.f32.gmra.mxu0 %v250
      %v366 = vpop.f32.mrf.mxu0
      %v367 = vadd.f32 0.0, %v366
      %368 = vmatmul.f32.gmra.mxu0 %v253
      %v369 = vpop.f32.mrf.mxu0
      %v370 = vadd.f32 0.0, %v369
      %371 = vmatmul.f32.gmra.mxu0 %v256
      %v372 = vpop.f32.mrf.mxu0
      %v373 = vadd.f32 0.0, %v372
      %374 = vmatmul.f32.gmra.mxu0 %v259
      %v375 = vpop.f32.mrf.mxu0
      %v376 = vadd.f32 0.0, %v375
      %377 = vmatmul.f32.gmra.mxu0 %v262
      %v378 = vpop.f32.mrf.mxu0
      %v379 = vadd.f32 0.0, %v378
      %380 = vmatmul.f32.gmra.mxu0 %v265
      %v381 = vpop.f32.mrf.mxu0
      %v382 = vadd.f32 0.0, %v381
      %383 = vmatmul.f32.gmra.mxu0 %v268
      %v384 = vpop.f32.mrf.mxu0
      %v385 = vadd.f32 0.0, %v384
      %386 = vmatmul.f32.gmra.mxu0 %v271
      %v387 = vpop.f32.mrf.mxu0
      %v388 = vadd.f32 0.0, %v387
      %389 = vmatmul.f32.gmra.mxu0 %v274
      %v390 = vpop.f32.mrf.mxu0
      %v391 = vadd.f32 0.0, %v390
      %392 = vmatmul.f32.gmra.mxu0 %v277
      %v393 = vpop.f32.mrf.mxu0
      %v394 = vadd.f32 0.0, %v393
      %395 = vmatmul.f32.gmra.mxu0 %v280
      %v396 = vpop.f32.mrf.mxu0
      %v397 = vadd.f32 0.0, %v396
      %398 = vmatmul.f32.gmra.mxu0 %v283
      %v399 = vpop.f32.mrf.mxu0
      %v400 = vadd.f32 0.0, %v399
      %401 = vmatmul.f32.gmra.mxu0 %v286
      %v402 = vpop.f32.mrf.mxu0
      %v403 = vadd.f32 0.0, %v402
      %404 = vmatmul.f32.gmra.mxu0 %v289
      %v405 = vpop.f32.mrf.mxu0
      %v406 = vadd.f32 0.0, %v405
      %407 = vmatmul.f32.gmra.mxu0 %v292
      %v408 = vpop.f32.mrf.mxu0
      %v409 = vadd.f32 0.0, %v408
      %410 = vmatmul.f32.gmra.mxu0 %v295
      %v411 = vpop.f32.mrf.mxu0
      %v412 = vadd.f32 0.0, %v411
      %413 = vmatmul.f32.gmra.mxu0 %v298
      %v414 = vpop.f32.mrf.mxu0
      %v415 = vadd.f32 0.0, %v414
      %416 = vmatmul.f32.gmra.mxu0 %v301
      %v417 = vpop.f32.mrf.mxu0
      %v418 = vadd.f32 0.0, %v417
      %419 = vmatmul.f32.gmra.mxu0 %v304
      %v420 = vpop.f32.mrf.mxu0
      %v421 = vadd.f32 0.0, %v420
      %422 = vmatmul.f32.gmra.mxu0 %v307
      %v423 = vpop.f32.mrf.mxu0
      %v424 = vadd.f32 0.0, %v423
      %425 = vmatmul.f32.gmra.mxu0 %v310
      %v426 = vpop.f32.mrf.mxu0
      %v427 = vadd.f32 0.0, %v426
      %428 = vmatmul.f32.gmra.mxu0 %v313
      %v429 = vpop.f32.mrf.mxu0
      %v430 = vadd.f32 0.0, %v429
      %431 = vmatmul.f32.gmra.mxu0 %v316
      %v432 = vpop.f32.mrf.mxu0
      %v433 = vadd.f32 0.0, %v432
      %434 = vdwg.mxu0
      %435 = vst [vmem:[%s179] sm:$0xff] %v340
      %436 = vst [vmem:[%s179 + $0x8] sm:$0xff] %v343
      %437 = vst [vmem:[%s179 + $0x10] sm:$0xff] %v346
      %438 = vst [vmem:[%s179 + $0x18] sm:$0xff] %v349
      %439 = vst [vmem:[%s179 + $0x20] sm:$0xff] %v352
      %440 = vst [vmem:[%s179 + $0x28] sm:$0xff] %v355
      %441 = vst [vmem:[%s179 + $0x30] sm:$0xff] %v358
      %442 = vst [vmem:[%s179 + $0x38] sm:$0xff] %v361
      %443 = vst [vmem:[%s179 + $0x40] sm:$0xff] %v364
      %444 = vst [vmem:[%s179 + $0x48] sm:$0xff] %v367
      %445 = vst [vmem:[%s179 + $0x50] sm:$0xff] %v370
      %446 = vst [vmem:[%s179 + $0x58] sm:$0xff] %v373
      %447 = vst [vmem:[%s179 + $0x60] sm:$0xff] %v376
      %448 = vst [vmem:[%s179 + $0x68] sm:$0xff] %v379
      %449 = vst [vmem:[%s179 + $0x70] sm:$0xff] %v382
      %450 = vst [vmem:[%s179 + $0x78] sm:$0xff] %v385
      %451 = vst [vmem:[%s179 + $0x80] sm:$0xff] %v388
      %452 = vst [vmem:[%s179 + $0x88] sm:$0xff] %v391
      %453 = vst [vmem:[%s179 + $0x90] sm:$0xff] %v394
      %454 = vst [vmem:[%s179 + $0x98] sm:$0xff] %v397
      %455 = vst [vmem:[%s179 + $0xa0] sm:$0xff] %v400
      %456 = vst [vmem:[%s179 + $0xa8] sm:$0xff] %v403
      %457 = vst [vmem:[%s179 + $0xb0] sm:$0xff] %v406
      %458 = vst [vmem:[%s179 + $0xb8] sm:$0xff] %v409
      %459 = vst [vmem:[%s179 + $0xc0] sm:$0xff] %v412
      %460 = vst [vmem:[%s179 + $0xc8] sm:$0xff] %v415
      %461 = vst [vmem:[%s179 + $0xd0] sm:$0xff] %v418
      %462 = vst [vmem:[%s179 + $0xd8] sm:$0xff] %v421
      %463 = vst [vmem:[%s179 + $0xe0] sm:$0xff] %v424
      %464 = vst [vmem:[%s179 + $0xe8] sm:$0xff] %v427
      %465 = vst [vmem:[%s179 + $0xf0] sm:$0xff] %v430
      %466 = vst [vmem:[%s179 + $0xf8] sm:$0xff] %v433
      %v467 = vadd.f32 %v340, %v343
      %v468 = vadd.f32 %v467, %v346
      %v469 = vadd.f32 %v468, %v349
      %v470 = vadd.f32 %v469, %v352
      %v471 = vadd.f32 %v470, %v355
      %v472 = vadd.f32 %v471, %v358
      %v473 = vadd.f32 %v472, %v361
      %v474 = vadd.f32 %v473, %v364
      %v475 = vadd.f32 %v474, %v367
      %v476 = vadd.f32 %v475, %v370
      %v477 = vadd.f32 %v476, %v373
      %v478 = vadd.f32 %v477, %v376
      %v479 = vadd.f32 %v478, %v379
      %v480 = vadd.f32 %v479, %v382
      %v481 = vadd.f32 %v480, %v385
      %v482 = vadd.f32 %v481, %v388
      %v483 = vadd.f32 %v482, %v391
      %v484 = vadd.f32 %v483, %v394
      %v485 = vadd.f32 %v484, %v397
      %v486 = vadd.f32 %v485, %v400
      %v487 = vadd.f32 %v486, %v403
      %v488 = vadd.f32 %v487, %v406
      %v489 = vadd.f32 %v488, %v409
      %v490 = vadd.f32 %v489, %v412
      %v491 = vadd.f32 %v490, %v415
      %v492 = vadd.f32 %v491, %v418
      %v493 = vadd.f32 %v492, %v421
      %v494 = vadd.f32 %v493, %v424
      %v495 = vadd.f32 %v494, %v427
      %v496 = vadd.f32 %v495, %v430
      %v497 = vadd.f32 %v496, %v433
      %v498 = vrot.slane %v497, 4
      %v499 = vadd.f32 %v497, %v498
      %v500 = vrot.slane %v499, 2
      %v501 = vadd.f32 %v499, %v500
      %v502 = vrot.slane %v501, 1
      %v503 = vadd.f32 %v501, %v502
      %v504 = vmul.f32 %v340, %v340
      %v505 = vmul.f32 %v343, %v343
      %v506 = vmul.f32 %v346, %v346
      %v507 = vmul.f32 %v349, %v349
      %v508 = vmul.f32 %v352, %v352
      %v509 = vmul.f32 %v355, %v355
      %v510 = vmul.f32 %v358, %v358
      %v511 = vmul.f32 %v361, %v361
      %v512 = vmul.f32 %v364, %v364
      %v513 = vmul.f32 %v367, %v367
      %v514 = vmul.f32 %v370, %v370
      %v515 = vmul.f32 %v373, %v373
      %v516 = vmul.f32 %v376, %v376
      %v517 = vmul.f32 %v379, %v379
      %v518 = vmul.f32 %v382, %v382
      %v519 = vmul.f32 %v385, %v385
      %v520 = vmul.f32 %v388, %v388
      %v521 = vmul.f32 %v391, %v391
      %v522 = vmul.f32 %v394, %v394
      %v523 = vmul.f32 %v397, %v397
      %v524 = vmul.f32 %v400, %v400
      %v525 = vmul.f32 %v403, %v403
      %v526 = vmul.f32 %v406, %v406
      %v527 = vmul.f32 %v409, %v409
      %v528 = vmul.f32 %v412, %v412
      %v529 = vmul.f32 %v415, %v415
      %v530 = vmul.f32 %v418, %v418
      %v531 = vmul.f32 %v421, %v421
      %v532 = vmul.f32 %v424, %v424
      %v533 = vmul.f32 %v427, %v427
      %v534 = vmul.f32 %v430, %v430
      %v535 = vmul.f32 %v433, %v433
      %v536 = vadd.f32 %v504, %v505
      %v537 = vadd.f32 %v536, %v506
      %v538 = vadd.f32 %v537, %v507
      %v539 = vadd.f32 %v538, %v508
      %v540 = vadd.f32 %v539, %v509
      %v541 = vadd.f32 %v540, %v510
      %v542 = vadd.f32 %v541, %v511
      %v543 = vadd.f32 %v542, %v512
      %v544 = vadd.f32 %v543, %v513
      %v545 = vadd.f32 %v544, %v514
      %v546 = vadd.f32 %v545, %v515
      %v547 = vadd.f32 %v546, %v516
      %v548 = vadd.f32 %v547, %v517
      %v549 = vadd.f32 %v548, %v518
      %v550 = vadd.f32 %v549, %v519
      %v551 = vadd.f32 %v550, %v520
      %v552 = vadd.f32 %v551, %v521
      %v553 = vadd.f32 %v552, %v522
      %v554 = vadd.f32 %v553, %v523
      %v555 = vadd.f32 %v554, %v524
      %v556 = vadd.f32 %v555, %v525
      %v557 = vadd.f32 %v556, %v526
      %v558 = vadd.f32 %v557, %v527
      %v559 = vadd.f32 %v558, %v528
      %v560 = vadd.f32 %v559, %v529
      %v561 = vadd.f32 %v560, %v530
      %v562 = vadd.f32 %v561, %v531
      %v563 = vadd.f32 %v562, %v532
      %v564 = vadd.f32 %v563, %v533
      %v565 = vadd.f32 %v564, %v534
      %v566 = vadd.f32 %v565, %v535
      %v567 = vrot.slane %v566, 4
      %v568 = vadd.f32 %v566, %v567
      %v569 = vrot.slane %v568, 2
      %v570 = vadd.f32 %v568, %v569
      %v571 = vrot.slane %v570, 1
      %v572 = vadd.f32 %v570, %v571
      %vm573 = vcmask 1040384
      %v574 = vsel %vm573, %v503, %v572
      %575 = vst [vmem:[%s184] sm:$0x3] %v574
      %s576 = smul.u32 32, %s15
      %p577 = scmp.lt.s32.totalorder %s576, 63
      %s578 = scalar_select %p577, %s576, 63
      %s579 = smul.addr %s578, 8
      %s580 = scalar_lea.vmem %s2, %s579
      %p581 = scmp.lt.s32.totalorder %s15, 1
      %s582 = scalar_select %p581, %s15, 1
      %s583 = smul.addr %s582, 2
      %s584 = scalar_lea.vmem %s3, %s583
      // Predicated region
      $region29: #{cnnblock_forward.2} parent=27 // pred_check
        %p585 = pneg %p80
      $region30: #{cnnblock_forward.2} parent=27 // pred_check_branch
        %587 = sbr.rel (%p585) target = $region32
      $region31: #{cnnblock_forward.2} parent=27 // pred_region
        %s588 = smul.u32 32, %s15
      $region32: #{cnnblock_forward.2} parent=27 // pred_fallthru
        _
      // Predicated region
      $region33: #{cnnblock_forward.2} parent=27 // pred_check
        %p589 = pneg %p106
      $region34: #{cnnblock_forward.2} parent=27 // pred_check_branch
        %591 = sbr.rel (%p589) target = $region36
      $region35: #{cnnblock_forward.2} parent=27 // pred_region
        _
      $region36: #{cnnblock_forward.2} parent=27 // pred_fallthru
        _
    $region28: #{cnnblock_forward.2} parent=5 // pred_fallthru
      _
    %p592 = scmp.le.s32.totalorder 2, %s10
    // Predicated region
    $region37: #{cnnblock_forward.2} parent=5 // pred_check
      %p593 = pneg %p592
    $region38: #{cnnblock_forward.2} parent=5 // pred_check_branch
      %595 = sbr.rel (%p593) target = $region40
    $region39: #{cnnblock_forward.2} parent=5 // pred_region
      %s596 = ssub.s32 %s10, 2
      // Predicated region
      $region41: #{cnnblock_forward.2} parent=39 // pred_check
        %p597 = pneg %p86
      $region42: #{cnnblock_forward.2} parent=39 // pred_check_branch
        %599 = sbr.rel (%p597) target = $region44
      $region43: #{cnnblock_forward.2} parent=39 // pred_region
        %s600 = smul.u32 32, %s16
        %p601 = scmp.lt.s32.totalorder %s600, 63
        %s602 = scalar_select %p601, %s600, 63
        %s603 = smul.addr %s602, 8
        %s604 = scalar_lea.vmem %s2, %s603
      $region44: #{cnnblock_forward.2} parent=39 // pred_fallthru
        _
      // Predicated region
      $region45: #{cnnblock_forward.2} parent=39 // pred_check
        %p605 = pneg %p112
      $region46: #{cnnblock_forward.2} parent=39 // pred_check_branch
        %607 = sbr.rel (%p605) target = $region48
      $region47: #{cnnblock_forward.2} parent=39 // pred_region
        %p608 = scmp.lt.s32.totalorder %s16, 1
        %s609 = scalar_select %p608, %s16, 1
        %s610 = smul.addr %s609, 2
        %s611 = scalar_lea.vmem %s3, %s610
      $region48: #{cnnblock_forward.2} parent=39 // pred_fallthru
        _
    $region40: #{cnnblock_forward.2} parent=5 // pred_fallthru
      _
  $region6: #{cnnblock_forward.2} parent=0 // loop_footer
    %s14 = sadd.s32 1, %s10
  $region7: #{cnnblock_forward.2} parent=0 // loop_footer_branch
    %9 = sbr.rel target = $region3
  $region8: #{cnnblock_forward.2} parent=0 // loop_exit
    _

</llo_original>
